<compile_context>
chip_gen: v6e
topology: v6e:2x2x1
jax: 0.10.0
libtpu: 0.0.40
codegen_flags: <defaults>
</compile_context>

<pallas_src>
import functools

import jax
import jax.numpy as jnp
from jax.experimental import pallas as pl
from jax.experimental.pallas import tpu as pltpu


# ---------------------------------------------------------------------------
# Tile selection
# ---------------------------------------------------------------------------

def _pick_tile(dim, target, align):
    """Largest multiple of `align` that divides `dim` and is <= `target`.

    Falls back to the full dimension (always legal: block == array extent),
    so no partial tiles ever reach the accumulating reduction.
    """
    if dim <= target:
        return dim
    t = (target // align) * align
    while t >= align:
        if dim % t == 0:
            return t
        t -= align
    return dim


# ---------------------------------------------------------------------------
# Kernels
# ---------------------------------------------------------------------------

def _cls_kernel(last_ref, out_ref):
    # out[b, h] = last_hidden[b, 0, h]
    # The BlockSpec only brings in the first (<=8)-row sequence slab.
    out_ref[...] = last_ref[:, 0, :]


def _masked_avg_kernel(mask_ref, *refs, num_hidden):
    """Accumulating masked average over the sequence axis.

    Grid: (batch tiles [parallel], seq tiles [arbitrary / reduction]).
    refs = (h_0, ..., h_{num_hidden-1}, out_ref, num_acc, den_acc)
    """
    hidden_refs = refs[:num_hidden]
    out_ref, num_acc, den_acc = refs[num_hidden:]

    s = pl.program_id(1)

    @pl.when(s == 0)
    def _init():
        num_acc[...] = jnp.zeros_like(num_acc)
        den_acc[...] = jnp.zeros_like(den_acc)

    h = hidden_refs[0][...]                       # (TB, TS, H)
    for r in hidden_refs[1:]:
        h = h + r[...]

    mask = mask_ref[...]                          # (TB, TS) float32
    # MXU contraction: (TB, 1, TS) @ (TB, TS, H) -> (TB, 1, H), f32 accumulate.
    mask3 = mask.astype(h.dtype)[:, None, :]
    num_acc[...] += jnp.einsum('bqs,bsh->bqh', mask3, h,
                               preferred_element_type=jnp.float32)
    den_acc[...] += jnp.sum(mask, axis=1, keepdims=True)

    @pl.when(s == pl.num_programs(1) - 1)
    def _finalize():
        # Fold the "/ num_hidden" of the two-layer variants in here
        # (multiplication by 0.5 is exact, so this matches the reference).
        scale = 1.0 / float(num_hidden)
        out = (num_acc[:, 0, :] * scale) / den_acc[...]
        out_ref[...] = out.astype(out_ref.dtype)


# ---------------------------------------------------------------------------
# Wrappers
# ---------------------------------------------------------------------------

def _pool_cls(last_hidden):
    B, S, H = last_hidden.shape
    tb = _pick_tile(B, 8, 8)          # divides B (or == B)
    ts = min(S, 8)                    # only row 0 is needed; fetch aligned slab
    grid = (B // tb,)
    return pl.pallas_call(
        _cls_kernel,
        out_shape=jax.ShapeDtypeStruct((B, H), last_hidden.dtype),
        grid=grid,
        in_specs=[pl.BlockSpec((tb, ts, H), lambda i: (i, 0, 0))],
        out_specs=pl.BlockSpec((tb, H), lambda i: (i, 0)),
        compiler_params=pltpu.CompilerParams(
            dimension_semantics=("parallel",)),
    )(last_hidden)


def _pool_masked_avg(attention_mask, hidden_list):
    num_hidden = len(hidden_list)
    B, S, H = hidden_list[0].shape
    dtype = hidden_list[0].dtype

    tb = _pick_tile(B, 8, 8)
    # One double-buffered (tb, ts, H) slab per hidden input; keep the total
    # comfortably inside v7x's 64 MiB physical VMEM.
    ts_target = 512 if num_hidden == 1 else 256
    ts = _pick_tile(S, ts_target, 128)

    mask_f = attention_mask.astype(jnp.float32)
    grid = (B // tb, S // ts)

    hidden_spec = pl.BlockSpec((tb, ts, H), lambda i, s: (i, s, 0))
    in_specs = ([pl.BlockSpec((tb, ts), lambda i, s: (i, s))]
                + [hidden_spec] * num_hidden)

    kernel = functools.partial(_masked_avg_kernel, num_hidden=num_hidden)

    return pl.pallas_call(
        kernel,
        out_shape=jax.ShapeDtypeStruct((B, H), dtype),
        grid=grid,
        in_specs=in_specs,
        # Same output block for every seq step -> resident accumulator output.
        out_specs=pl.BlockSpec((tb, H), lambda i, s: (i, 0)),
        scratch_shapes=[pltpu.VMEM((tb, 1, H), jnp.float32),   # numerator acc
                        pltpu.VMEM((tb, 1), jnp.float32)],     # denominator acc
        compiler_params=pltpu.CompilerParams(
            dimension_semantics=("parallel", "arbitrary"),
            vmem_limit_bytes=48 << 20),
    )(mask_f, *hidden_list)


def pooler(pooler_type, attention_mask, last_hidden, hidden_states):
    """JAX/Pallas equivalent of Pooler.forward.

    attention_mask : (B, S)         int or float
    last_hidden    : (B, S, H)      == outputs.last_hidden_state
    hidden_states  : tuple of (B, S, H) arrays == outputs.hidden_states
                     (hidden_states[0] = embeddings, [1] = first layer,
                      [-1] = last layer)
    """
    assert pooler_type in ['cls', 'cls_before_pooler', 'avg', 'avg_top2',
                           'avg_first_last'], \
        'unrecognized pooling type %s' % pooler_type
    if pooler_type in ['cls', 'cls_before_pooler']:
        return _pool_cls(last_hidden)
    elif pooler_type == 'avg':
        return _pool_masked_avg(attention_mask, [last_hidden])
    elif pooler_type == 'avg_first_last':
        return _pool_masked_avg(attention_mask,
                                [hidden_states[1], hidden_states[-1]])
    elif pooler_type == 'avg_top2':
        return _pool_masked_avg(attention_mask,
                                [hidden_states[-2], hidden_states[-1]])
    else:
        raise NotImplementedError


# ---------------------------------------------------------------------------
# Pure-JAX reference (mirrors the PyTorch forward exactly)
# ---------------------------------------------------------------------------

def pooler_ref(pooler_type, attention_mask, last_hidden, hidden_states):
    mask = attention_mask.astype(last_hidden.dtype)
    if pooler_type in ['cls', 'cls_before_pooler']:
        return last_hidden[:, 0]
    elif pooler_type == 'avg':
        return (last_hidden * mask[..., None]).sum(1) / mask.sum(-1)[:, None]
    elif pooler_type == 'avg_first_last':
        h = (hidden_states[1] + hidden_states[-1]) / 2.0
        return (h * mask[..., None]).sum(1) / mask.sum(-1)[:, None]
    elif pooler_type == 'avg_top2':
        h = (hidden_states[-2] + hidden_states[-1]) / 2.0
        return (h * mask[..., None]).sum(1) / mask.sum(-1)[:, None]
    else:
        raise NotImplementedError


# ---------------------------------------------------------------------------
# Demo
# ---------------------------------------------------------------------------

if __name__ == "__main__":
    B, S, H = 2, 8, 32
    num_layers = 4  # hidden_states has (embeddings + num_layers) entries

    key = jax.random.PRNGKey(0)
    keys = jax.random.split(key, num_layers + 2)

    # outputs.hidden_states: tuple of (B, S, H), index 0 = embedding output.
    hidden_states = tuple(
        jax.random.normal(keys[i], (B, S, H), dtype=jnp.float32)
        for i in range(num_layers + 1)
    )
    last_hidden = hidden_states[-1]  # outputs.last_hidden_state

    # attention_mask: first row fully valid, second row has padding.
    attention_mask = jnp.array(
        [[1, 1, 1, 1, 1, 1, 1, 1],
         [1, 1, 1, 1, 1, 0, 0, 0]], dtype=jnp.int32)
    assert attention_mask.shape == (B, S)

    ok = True
    for ptype in ['cls', 'cls_before_pooler', 'avg', 'avg_first_last',
                  'avg_top2']:
        out = pooler(ptype, attention_mask, last_hidden, hidden_states)
        out = jax.block_until_ready(out)
        ref = pooler_ref(ptype, attention_mask, last_hidden, hidden_states)
        if out.shape != (B, H):
            ok = False
        if not jnp.allclose(out, ref, atol=1e-5, rtol=1e-5):
            ok = False

    if ok:
        print("KERNEL_OK")
    else:
        print("KERNEL_MISMATCH")
</pallas_src>

<mosaic_0001>
module attributes {stable_mosaic.version = 11 : i64} {
  func.func @_cls_kernel(%arg0: i32, %arg1: memref<2x8x32xf32, #tpu.memory_space<vmem>>, %arg2: memref<2x32xf32, #tpu.memory_space<vmem>>) attributes {dimension_semantics = [#tpu.dimension_semantics<parallel>], iteration_bounds = array<i64: 1>, scalar_prefetch = 0 : i64, scratch_operands = 0 : i64, tpu.core_type = #tpu.core_type<tc>, window_params = [{transform_indices = @transform_0, window_bounds = array<i64: 2, 8, 32>}, {transform_indices = @transform_1, window_bounds = array<i64: 2, 32>}]} {
    %c0 = arith.constant 0 : index
    %c0_0 = arith.constant 0 : index
    %c0_1 = arith.constant 0 : index
    %0 = vector.load %arg1[%c0, %c0_0, %c0_1] : memref<2x8x32xf32, #tpu.memory_space<vmem>>, vector<2x1x32xf32>
    %1 = vector.shape_cast %0 : vector<2x1x32xf32> to vector<2x32xf32>
    %c0_2 = arith.constant 0 : index
    %c0_3 = arith.constant 0 : index
    %2 = vector.load %arg2[%c0_2, %c0_3] : memref<2x32xf32, #tpu.memory_space<vmem>>, vector<2x32xf32>
    tpu.vector_store %arg2[%c0_2, %c0_3], %1 {strides = array<i32>} : memref<2x32xf32, #tpu.memory_space<vmem>>, vector<2x32xf32>,
    return
  }
  func.func @transform_0(%arg0: i32) -> (i32, i32, i32) {
    %c0_i32 = arith.constant 0 : i32
    %c0_i32_0 = arith.constant 0 : i32
    %c0_i32_1 = arith.constant 0 : i32
    return %arg0, %c0_i32, %c0_i32_0 : i32, i32, i32
  }
  func.func @transform_1(%arg0: i32) -> (i32, i32) {
    %c0_i32 = arith.constant 0 : i32
    %c0_i32_0 = arith.constant 0 : i32
    return %arg0, %c0_i32 : i32, i32
  }
}

</mosaic_0001>

<llo_original>
// kernel: tpu_custom_call.1
$region0: #{tpu_custom_call.1}
  #allocation0 [shape = 'u32[]', space=smem, size = 0x4, offset = 0x4, fixed_abs, tag = 'smem constant byte address 0x4 - core index']
  #allocation1 [shape = 'u32[144,128]{1,0:T(1,128)}', space=vmem, size = 0x12000, scoped, tag = 'internal scratch']
  %s0 = inlined_call_operand.hbm [shape: f32[2,8,32], index: 0, kind: input, shape index: {}]
  %s1 = inlined_call_operand.hbm [shape: f32[2,32], index: 1, kind: output, shape index: {}]
  %s2 = sld [smem:[#allocation0]]
  $region18: #{tpu_custom_call.1} parent=0
    _
  %s4 = ssub.s32 1, %s2
  %s5 = scalar_select 0, %s4, %s2
  $region1: #{tpu_custom_call.1} parent=0
    #allocation2 [shape = 'u8[8192]{0}', space=vmem, size = 0x2000, scoped, tag = 'input window, operand 0, single buffered']
    #allocation3 [shape = 's32[1]{0}', space=sflag, size = 0x4, scoped, tag = 'scoped memory for tpu_custom_call.1']
    #allocation4 [shape = 's32[1]{0}', space=sflag, size = 0x4, scoped, tag = 'scoped memory for tpu_custom_call.1']
    #allocation5 [shape = 'u8[1024]{0}', space=vmem, size = 0x400, scoped, tag = 'output window, operand 0, single buffered']
    %6 = vsyncpa [#allocation3], 0
    %7 = vsyncpa [#allocation4], 0
    // Predicated region
    $region2: #{tpu_custom_call.1} parent=1 // pred_check
      _
    $region3: #{tpu_custom_call.1} parent=1 // pred_check_branch
      %9 = sbr.rel (0) target = $region5
    $region4: #{tpu_custom_call.1} parent=1 // pred_region
      %s11 = ssub.s32 256, 256
      %12 = vsyncadd [#allocation3], %s11
      %s13 = sshll.u32 [#allocation2], 4
      %s14 = int_to_ptr.vmem [resolvable:$true] %s13
      %19 = dma.hbm_to_vmem [thread:$0]  %s0, 256, %s14, [#allocation3], 128, 128, 8
    $region5: #{tpu_custom_call.1} parent=1 // pred_fallthru
      _
    // Predicated region
    $region6: #{tpu_custom_call.1} parent=1 // pred_check
      _
    $region7: #{tpu_custom_call.1} parent=1 // pred_check_branch
      %21 = sbr.rel (0) target = $region9
    $region8: #{tpu_custom_call.1} parent=1 // pred_region
      %22 = dma.done [#allocation3], 256
    $region9: #{tpu_custom_call.1} parent=1 // pred_fallthru
      _
    %v23 = vld [vmem:[#allocation2] sm:$0x1]
    %v24 = vld [vmem:[#allocation2 + $0x8] sm:$0x1]
    %v27 = vrot.slane %v24, 7
    %vm28 = vcmask 1041409
    %v29 = vsel %vm28, %v27, %v23
    %vm31 = vcmask 254976
    %32 = vst.msk [vmem:[#allocation5] sm:$0x3] %vm31, %v29
    // Predicated region
    $region10: #{tpu_custom_call.1} parent=1 // pred_check
      _
    $region11: #{tpu_custom_call.1} parent=1 // pred_check_branch
      %34 = sbr.rel (0) target = $region13
    $region12: #{tpu_custom_call.1} parent=1 // pred_region
      %s36 = ssub.s32 32, 32
      %37 = vsyncadd [#allocation4], %s36
      %s39 = sshll.u32 [#allocation5], 4
      %s40 = int_to_ptr.vmem [resolvable:$true] %s39
      %42 = dma.vmem_to_hbm [thread:$0]  %s40, 32, %s1, [#allocation4]
    $region13: #{tpu_custom_call.1} parent=1 // pred_fallthru
      _
    // Predicated region
    $region14: #{tpu_custom_call.1} parent=1 // pred_check
      _
    $region15: #{tpu_custom_call.1} parent=1 // pred_check_branch
      %44 = sbr.rel (0) target = $region17
    $region16: #{tpu_custom_call.1} parent=1 // pred_region
      %45 = dma.done [#allocation4], 32
    $region17: #{tpu_custom_call.1} parent=1 // pred_fallthru
      _
    %46 = vsyncpa [#allocation3], 1
    %47 = vsyncpa [#allocation4], 1

</llo_original>
